<compile_context>
chip_gen: v7x
topology: tpu7x:2x2x1
jax: 0.10.0
libtpu: 0.0.40
codegen_flags: <defaults>
</compile_context>

<pallas_src>
import jax
import jax.numpy as jnp
from jax.experimental import pallas as pl
from jax.experimental.pallas import tpu as pltpu


def spatial_positional_encoding(x, emb):
    """x: (B, N, T, D) float32, emb: (N, D) float32 -> (B, N, T, D)."""
    B, N, T, D = x.shape
    assert emb.shape == (N, D)

    # Lane-dense, 2-D layout: (B, N, T, D) -> (B*N, T*D).
    # Row b*N+n, column t*D+d  <->  element (b, n, t, d); contiguous row-major
    # view, so the reshape is free.
    x_flat = x.reshape(B * N, T * D)

    def kernel(x_ref, emb_ref, o_ref):
        # emb_ref: (N, D).  Tile B times over rows and T times over lanes so
        # emb_rep[b*N+n, t*D+d] == emb[n, d]; this replication now happens
        # exactly once (single grid step).
        emb_rep = jnp.tile(emb_ref[...], (B, T))       # (B*N, T*D)
        o_ref[...] = x_ref[...] + emb_rep
        # dropout is identity at inference time (eval mode) -> nothing to do.

    elems = B * N * T * D
    out = pl.pallas_call(
        kernel,
        out_shape=jax.ShapeDtypeStruct((B * N, T * D), x.dtype),
        # No grid: one invocation, whole arrays resident in VMEM.
        in_specs=[
            pl.BlockSpec(memory_space=pltpu.MemorySpace.VMEM),  # x slab
            pl.BlockSpec(memory_space=pltpu.MemorySpace.VMEM),  # embedding
        ],
        out_specs=pl.BlockSpec(memory_space=pltpu.MemorySpace.VMEM),
        input_output_aliases={0: 0},                   # out aliases x_flat
        cost_estimate=pl.CostEstimate(
            flops=elems,                               # one add per element
            transcendentals=0,
            bytes_accessed=2 * elems * 4 + N * D * 4,
        ),
    )(x_flat, emb)

    return out.reshape(B, N, T, D)


# ---------------- pure-JAX reference (for correctness check) ----------------
def ref_forward(x, emb):
    # x + embedding(arange(N)).unsqueeze(0).unsqueeze(2); dropout identity.
    return x + emb[None, :, None, :]


if __name__ == "__main__":
    # Small shapes consistent with the module: (batch, N_vertices, T, d_model).
    B, N, T, D = 2, 8, 8, 32

    key = jax.random.PRNGKey(0)
    k_x, k_e = jax.random.split(key)
    x = jax.random.normal(k_x, (B, N, T, D), jnp.float32)
    emb = 0.1 * jax.random.normal(k_e, (N, D), jnp.float32)  # Embedding.weight

    out = jax.block_until_ready(spatial_positional_encoding(x, emb))
    ref = jax.block_until_ready(ref_forward(x, emb))

    assert out.shape == (B, N, T, D)
    assert jnp.allclose(out, ref, atol=1e-6, rtol=1e-6), \
        f"max abs err {jnp.max(jnp.abs(out - ref))}"
    print("KERNEL_OK")
</pallas_src>

<mosaic_0001>
module attributes {stable_mosaic.version = 11 : i64} {
  func.func @kernel(%arg0: memref<16x256xf32, #tpu.memory_space<vmem>>, %arg1: memref<8x32xf32, #tpu.memory_space<vmem>>, %arg2: memref<16x256xf32, #tpu.memory_space<vmem>>) attributes {dimension_semantics = [], scalar_prefetch = 0 : i64, scratch_operands = 0 : i64, tpu.core_type = #tpu.core_type<tc>} {
    %c0 = arith.constant 0 : index
    %c0_0 = arith.constant 0 : index
    %0 = vector.load %arg1[%c0, %c0_0] : memref<8x32xf32, #tpu.memory_space<vmem>>, vector<8x32xf32>
    %1 = tpu.concatenate %0, %0 in 0 : vector<8x32xf32>, vector<8x32xf32> -> vector<16x32xf32>
    %2 = tpu.concatenate %1, %1, %1, %1, %1, %1, %1, %1 in 1 : vector<16x32xf32>, vector<16x32xf32>, vector<16x32xf32>, vector<16x32xf32>, vector<16x32xf32>, vector<16x32xf32>, vector<16x32xf32>, vector<16x32xf32> -> vector<16x256xf32>
    %c0_1 = arith.constant 0 : index
    %c0_2 = arith.constant 0 : index
    %3 = vector.load %arg0[%c0_1, %c0_2] : memref<16x256xf32, #tpu.memory_space<vmem>>, vector<16x256xf32>
    %4 = arith.addf %3, %2 : vector<16x256xf32>
    %c0_3 = arith.constant 0 : index
    %c0_4 = arith.constant 0 : index
    %5 = vector.load %arg2[%c0_3, %c0_4] : memref<16x256xf32, #tpu.memory_space<vmem>>, vector<16x256xf32>
    tpu.vector_store %arg2[%c0_3, %c0_4], %4 {strides = array<i32>} : memref<16x256xf32, #tpu.memory_space<vmem>>, vector<16x256xf32>,
    return
  }
}

</mosaic_0001>

<llo_original>
// kernel: tpu_custom_call.1
$region0: #{tpu_custom_call.1}
  #allocation0 [shape = 'u32[]', space=smem, size = 0x4, offset = 0x4, fixed_abs, tag = 'smem constant byte address 0x4 - core index']
  #allocation1 [shape = 'u32[144,128]{1,0:T(1,128)}', space=vmem, size = 0x12000, scoped, tag = 'internal scratch']
  %s0 = inlined_call_operand.hbm [shape: f32[16,256], index: 0, kind: input, shape index: {}, may-alias: {0,2}]
  %s1 = inlined_call_operand.vmem [shape: f32[8,32], index: 1, kind: input, shape index: {}]
  %s2 = inlined_call_operand.hbm [shape: f32[16,256], index: 2, kind: output, shape index: {}, may-alias: {0,2}]
  %s3 = sld [smem:[#allocation0]]
  $region22: #{tpu_custom_call.1} parent=0
    _
  %s5 = ssub.s32 1, %s3
  %s6 = scalar_select 0, %s5, %s3
  $region1: #{tpu_custom_call.1} parent=0
    #allocation2 [shape = 'u8[16384]{0}', space=vmem, size = 0x4000, scoped, tag = 'input window, operand 0, single buffered']
    #allocation3 [shape = 's32[1]{0}', space=sflag, size = 0x4, scoped, tag = 'scoped memory for tpu_custom_call.1']
    #allocation4 [shape = 's32[1]{0}', space=sflag, size = 0x4, scoped, tag = 'scoped memory for tpu_custom_call.1']
    #allocation5 [shape = 'u8[16384]{0}', space=vmem, size = 0x4000, scoped, tag = 'output window, operand 0, single buffered']
    %7 = vsyncpa [#allocation3], 0
    %8 = vsyncpa [#allocation4], 0
    // Predicated region
    $region2: #{tpu_custom_call.1} parent=1 // pred_check
      _
    $region3: #{tpu_custom_call.1} parent=1 // pred_check_branch
      %10 = sbr.rel (0) target = $region5
    $region4: #{tpu_custom_call.1} parent=1 // pred_region
      %s12 = ssub.s32 512, 512
      %13 = vsyncadd [#allocation3], %s12
      %s14 = sshll.u32 [#allocation2], 4
      %s15 = int_to_ptr.vmem [resolvable:$true] %s14
      %20 = dma.hbm_to_vmem [thread:$0]  %s0, 512, %s15, [#allocation3], 256, 256, 16
    $region5: #{tpu_custom_call.1} parent=1 // pred_fallthru
      _
    // Predicated region
    $region6: #{tpu_custom_call.1} parent=1 // pred_check
      _
    $region7: #{tpu_custom_call.1} parent=1 // pred_check_branch
      %22 = sbr.rel (0) target = $region9
    $region8: #{tpu_custom_call.1} parent=1 // pred_region
      _
    $region9: #{tpu_custom_call.1} parent=1 // pred_fallthru
      _
    // Predicated region
    $region10: #{tpu_custom_call.1} parent=1 // pred_check
      _
    $region11: #{tpu_custom_call.1} parent=1 // pred_check_branch
      %24 = sbr.rel (0) target = $region13
    $region12: #{tpu_custom_call.1} parent=1 // pred_region
      %25 = dma.done [#allocation3], 512
    $region13: #{tpu_custom_call.1} parent=1 // pred_fallthru
      _
    %v26 = vld [vmem:[%s1] sm:$0xff]
    %28 = vrot.lane.b32.xlu0 %v26, 32
    %v29 = vpop.permute.xlu0 %28
    %31 = vrot.lane.b32.xlu0 %v26, 64
    %v32 = vpop.permute.xlu0 %31
    %34 = vrot.lane.b32.xlu0 %v26, 96
    %v35 = vpop.permute.xlu0 %34
    %vm37 = vcmask 261120
    %v38 = vsel %vm37, %v26, %v29
    %vm39 = vcmask 523264
    %v40 = vsel %vm39, %v38, %v32
    %vm41 = vcmask 785408
    %v42 = vsel %vm41, %v40, %v35
    %v43 = vld [vmem:[#allocation2] sm:$0xff]
    %v44 = vld [vmem:[#allocation2 + $0x8] sm:$0xff]
    %v45 = vld [vmem:[#allocation2 + $0x10] sm:$0xff]
    %v46 = vld [vmem:[#allocation2 + $0x18] sm:$0xff]
    %v47 = vadd.f32 %v43, %v42
    %v48 = vadd.f32 %v44, %v42
    %v49 = vadd.f32 %v45, %v42
    %v50 = vadd.f32 %v46, %v42
    %51 = vst [vmem:[#allocation5] sm:$0xff] %v47
    %52 = vst [vmem:[#allocation5 + $0x8] sm:$0xff] %v48
    %53 = vst [vmem:[#allocation5 + $0x10] sm:$0xff] %v49
    %54 = vst [vmem:[#allocation5 + $0x18] sm:$0xff] %v50
    // Predicated region
    $region14: #{tpu_custom_call.1} parent=1 // pred_check
      _
    $region15: #{tpu_custom_call.1} parent=1 // pred_check_branch
      %56 = sbr.rel (0) target = $region17
    $region16: #{tpu_custom_call.1} parent=1 // pred_region
      %s58 = ssub.s32 512, 512
      %59 = vsyncadd [#allocation4], %s58
      %s60 = sshll.u32 [#allocation5], 4
      %s61 = int_to_ptr.vmem [resolvable:$true] %s60
      %66 = dma.vmem_to_hbm [thread:$0]  %s61, 512, %s2, [#allocation4], 256, 256, 16
    $region17: #{tpu_custom_call.1} parent=1 // pred_fallthru
      _
    // Predicated region
    $region18: #{tpu_custom_call.1} parent=1 // pred_check
      _
    $region19: #{tpu_custom_call.1} parent=1 // pred_check_branch
      %68 = sbr.rel (0) target = $region21
    $region20: #{tpu_custom_call.1} parent=1 // pred_region
      %69 = dma.done [#allocation4], 512
    $region21: #{tpu_custom_call.1} parent=1 // pred_fallthru
      _
    %70 = vsyncpa [#allocation3], 1
    %71 = vsyncpa [#allocation4], 1

</llo_original>
